<compile_context>
chip_gen: v7x
topology: tpu7x:2x2x1
jax: 0.10.0
libtpu: 0.0.40
codegen_flags: <defaults>
</compile_context>

<pallas_src>
import jax
import jax.numpy as jnp
from jax.experimental import pallas as pl
from jax.experimental.pallas import tpu as pltpu

F_HIDDEN = 10   # fc1 output width
LANES = 512     # lane width of the dense batch slab (multiple of 128)


def transition_kernel(p_ref, x_ref, o_ref):
    # p_ref: SMEM (31,) f32 = [w1[0:10] | b1[10:20] | w2[20:30] | b2[30]]
    # x_ref: (TR, LANES) f32  dense batch tile
    # o_ref: (TR, LANES) f32
    x = x_ref[...]

    # Hoist all scalar parameter reads (sld) above the unrolled feature loop.
    w1 = [p_ref[j] for j in range(F_HIDDEN)]
    b1 = [p_ref[F_HIDDEN + j] for j in range(F_HIDDEN)]
    w2 = [p_ref[2 * F_HIDDEN + j] for j in range(F_HIDDEN)]
    b2 = p_ref[3 * F_HIDDEN]

    # Statically unrolled 10-feature accumulator, all on the VPU.
    acc = w2[0] * jnp.maximum(w1[0] * x + b1[0], 0.0)
    for j in range(1, F_HIDDEN):
        acc = acc + w2[j] * jnp.maximum(w1[j] * x + b1[j], 0.0)
    o_ref[...] = acc + b2


def _round_up(n, m):
    return ((n + m - 1) // m) * m


def transition_forward(x, w1, b1, w2, b2, *, lanes=LANES, max_tile_rows=1024):
    """x: (B, 1); w1: (1, 10); b1: (10,); w2: (10, 1); b2: (1,) -> (B, 1)."""
    orig_dtype = x.dtype
    B = x.shape[0]

    # Dense 2-D batch slab: (rows, lanes) f32. Pad only a sub-lane-width tail.
    xf = x.reshape(-1).astype(jnp.float32)            # (B,)
    rows = pl.cdiv(B, lanes)
    Bp = rows * lanes
    if Bp != B:
        xf = jnp.pad(xf, (0, Bp - B))                 # tail-only (< lanes) pad
    x2d = xf.reshape(rows, lanes)

    # Row tile: multiple of 8 (or the full row count), capped at ~2 MiB/block,
    # and chosen so mid-sized batches still give >= 2 grid steps (v7x megacore).
    if rows <= 8:
        tile_rows = rows
    else:
        tile_rows = min(max_tile_rows, _round_up(pl.cdiv(rows, 2), 8))
    grid = (pl.cdiv(rows, tile_rows),)                # ragged last block is OK

    # Flat f32 parameter table for SMEM (31 scalars).
    params = jnp.concatenate([
        w1.reshape(F_HIDDEN).astype(jnp.float32),
        b1.reshape(F_HIDDEN).astype(jnp.float32),
        w2.reshape(F_HIDDEN).astype(jnp.float32),
        b2.reshape(1).astype(jnp.float32),
    ])

    out2d = pl.pallas_call(
        transition_kernel,
        out_shape=jax.ShapeDtypeStruct((rows, lanes), jnp.float32),
        grid_spec=pltpu.PrefetchScalarGridSpec(
            num_scalar_prefetch=0,
            grid=grid,
            in_specs=[
                # 31 f32 params, whole array resident in SMEM.
                pl.BlockSpec(memory_space=pltpu.MemorySpace.SMEM),
                # Streaming dense x tile.
                pl.BlockSpec((tile_rows, lanes), lambda i: (i, 0)),
            ],
            out_specs=pl.BlockSpec((tile_rows, lanes), lambda i: (i, 0)),
        ),
        compiler_params=pltpu.CompilerParams(
            dimension_semantics=("parallel",),
        ),
        # ~5 VPU ops per element per feature + final bias add; 1 read + 1 write.
        cost_estimate=pl.CostEstimate(
            flops=51 * B, transcendentals=0, bytes_accessed=8 * B),
    )(params, x2d)

    # Restore the PyTorch (B, 1) layout (single slice of the valid prefix).
    return out2d.reshape(-1)[:B].reshape(B, 1).astype(orig_dtype)


def reference_forward(x, w1, b1, w2, b2):
    h = jnp.maximum(x @ w1 + b1, 0.0)
    return h @ w2 + b2


if __name__ == "__main__":
    key = jax.random.PRNGKey(0)
    k_x, k_w1, k_b1, k_w2, k_b2 = jax.random.split(key, 5)

    B = 8  # batch of frames, each frame is a scalar feature
    x = jax.random.normal(k_x, (B, 1), dtype=jnp.float32)

    # Parameters stored as (in_features, out_features), matching
    # nn.Linear(1, 10) / nn.Linear(10, 1) applied as x @ W + b.
    w1 = jax.random.normal(k_w1, (1, 10), dtype=jnp.float32) * 0.5
    b1 = jax.random.normal(k_b1, (10,), dtype=jnp.float32) * 0.1
    w2 = jax.random.normal(k_w2, (10, 1), dtype=jnp.float32) * 0.5
    b2 = jax.random.normal(k_b2, (1,), dtype=jnp.float32) * 0.1

    out = transition_forward(x, w1, b1, w2, b2)
    jax.block_until_ready(out)

    ref = reference_forward(x, w1, b1, w2, b2)
    assert out.shape == (B, 1)
    assert jnp.allclose(out, ref, atol=1e-5, rtol=1e-5)

    # Larger batch exercising a multi-step grid and the ragged last row block.
    B2 = 20000
    x2 = jax.random.normal(jax.random.PRNGKey(1), (B2, 1), dtype=jnp.float32)
    out2 = transition_forward(x2, w1, b1, w2, b2)
    jax.block_until_ready(out2)
    ref2 = reference_forward(x2, w1, b1, w2, b2)
    assert jnp.allclose(out2, ref2, atol=1e-5, rtol=1e-5)

    print("KERNEL_OK")
</pallas_src>

<mosaic_0001>
module attributes {stable_mosaic.version = 11 : i64} {
  func.func @transition_kernel(%arg0: i32, %arg1: memref<31xf32, #tpu.memory_space<smem>>, %arg2: memref<1x512xf32, #tpu.memory_space<vmem>>, %arg3: memref<1x512xf32, #tpu.memory_space<vmem>>) attributes {dimension_semantics = [#tpu.dimension_semantics<parallel>], iteration_bounds = array<i64: 1>, scalar_prefetch = 0 : i64, scratch_operands = 0 : i64, tpu.core_type = #tpu.core_type<tc>, window_params = [{transform_indices = @transform_0, window_bounds = array<i64: 31>}, {transform_indices = @transform_1, window_bounds = array<i64: 1, 512>}, {transform_indices = @transform_2, window_bounds = array<i64: 1, 512>}]} {
    %c0 = arith.constant 0 : index
    %c0_0 = arith.constant 0 : index
    %0 = vector.load %arg2[%c0, %c0_0] : memref<1x512xf32, #tpu.memory_space<vmem>>, vector<1x512xf32>
    %c0_1 = arith.constant 0 : index
    %1 = memref.load %arg1[%c0_1] : memref<31xf32, #tpu.memory_space<smem>>
    %c1 = arith.constant 1 : index
    %2 = memref.load %arg1[%c1] : memref<31xf32, #tpu.memory_space<smem>>
    %c2 = arith.constant 2 : index
    %3 = memref.load %arg1[%c2] : memref<31xf32, #tpu.memory_space<smem>>
    %c3 = arith.constant 3 : index
    %4 = memref.load %arg1[%c3] : memref<31xf32, #tpu.memory_space<smem>>
    %c4 = arith.constant 4 : index
    %5 = memref.load %arg1[%c4] : memref<31xf32, #tpu.memory_space<smem>>
    %c5 = arith.constant 5 : index
    %6 = memref.load %arg1[%c5] : memref<31xf32, #tpu.memory_space<smem>>
    %c6 = arith.constant 6 : index
    %7 = memref.load %arg1[%c6] : memref<31xf32, #tpu.memory_space<smem>>
    %c7 = arith.constant 7 : index
    %8 = memref.load %arg1[%c7] : memref<31xf32, #tpu.memory_space<smem>>
    %c8 = arith.constant 8 : index
    %9 = memref.load %arg1[%c8] : memref<31xf32, #tpu.memory_space<smem>>
    %c9 = arith.constant 9 : index
    %10 = memref.load %arg1[%c9] : memref<31xf32, #tpu.memory_space<smem>>
    %c10 = arith.constant 10 : index
    %11 = memref.load %arg1[%c10] : memref<31xf32, #tpu.memory_space<smem>>
    %c11 = arith.constant 11 : index
    %12 = memref.load %arg1[%c11] : memref<31xf32, #tpu.memory_space<smem>>
    %c12 = arith.constant 12 : index
    %13 = memref.load %arg1[%c12] : memref<31xf32, #tpu.memory_space<smem>>
    %c13 = arith.constant 13 : index
    %14 = memref.load %arg1[%c13] : memref<31xf32, #tpu.memory_space<smem>>
    %c14 = arith.constant 14 : index
    %15 = memref.load %arg1[%c14] : memref<31xf32, #tpu.memory_space<smem>>
    %c15 = arith.constant 15 : index
    %16 = memref.load %arg1[%c15] : memref<31xf32, #tpu.memory_space<smem>>
    %c16 = arith.constant 16 : index
    %17 = memref.load %arg1[%c16] : memref<31xf32, #tpu.memory_space<smem>>
    %c17 = arith.constant 17 : index
    %18 = memref.load %arg1[%c17] : memref<31xf32, #tpu.memory_space<smem>>
    %c18 = arith.constant 18 : index
    %19 = memref.load %arg1[%c18] : memref<31xf32, #tpu.memory_space<smem>>
    %c19 = arith.constant 19 : index
    %20 = memref.load %arg1[%c19] : memref<31xf32, #tpu.memory_space<smem>>
    %c20 = arith.constant 20 : index
    %21 = memref.load %arg1[%c20] : memref<31xf32, #tpu.memory_space<smem>>
    %c21 = arith.constant 21 : index
    %22 = memref.load %arg1[%c21] : memref<31xf32, #tpu.memory_space<smem>>
    %c22 = arith.constant 22 : index
    %23 = memref.load %arg1[%c22] : memref<31xf32, #tpu.memory_space<smem>>
    %c23 = arith.constant 23 : index
    %24 = memref.load %arg1[%c23] : memref<31xf32, #tpu.memory_space<smem>>
    %c24 = arith.constant 24 : index
    %25 = memref.load %arg1[%c24] : memref<31xf32, #tpu.memory_space<smem>>
    %c25 = arith.constant 25 : index
    %26 = memref.load %arg1[%c25] : memref<31xf32, #tpu.memory_space<smem>>
    %c26 = arith.constant 26 : index
    %27 = memref.load %arg1[%c26] : memref<31xf32, #tpu.memory_space<smem>>
    %c27 = arith.constant 27 : index
    %28 = memref.load %arg1[%c27] : memref<31xf32, #tpu.memory_space<smem>>
    %c28 = arith.constant 28 : index
    %29 = memref.load %arg1[%c28] : memref<31xf32, #tpu.memory_space<smem>>
    %c29 = arith.constant 29 : index
    %30 = memref.load %arg1[%c29] : memref<31xf32, #tpu.memory_space<smem>>
    %c30 = arith.constant 30 : index
    %31 = memref.load %arg1[%c30] : memref<31xf32, #tpu.memory_space<smem>>
    %32 = vector.broadcast %1 : f32 to vector<1x512xf32>
    %33 = arith.mulf %32, %0 : vector<1x512xf32>
    %34 = vector.broadcast %11 : f32 to vector<1x512xf32>
    %35 = arith.addf %33, %34 : vector<1x512xf32>
    %cst = arith.constant 0.000000e+00 : f32
    %36 = vector.broadcast %cst : f32 to vector<1x512xf32>
    %37 = arith.maximumf %35, %36 : vector<1x512xf32>
    %38 = vector.broadcast %21 : f32 to vector<1x512xf32>
    %39 = arith.mulf %38, %37 : vector<1x512xf32>
    %40 = vector.broadcast %2 : f32 to vector<1x512xf32>
    %41 = arith.mulf %40, %0 : vector<1x512xf32>
    %42 = vector.broadcast %12 : f32 to vector<1x512xf32>
    %43 = arith.addf %41, %42 : vector<1x512xf32>
    %cst_2 = arith.constant 0.000000e+00 : f32
    %44 = vector.broadcast %cst_2 : f32 to vector<1x512xf32>
    %45 = arith.maximumf %43, %44 : vector<1x512xf32>
    %46 = vector.broadcast %22 : f32 to vector<1x512xf32>
    %47 = arith.mulf %46, %45 : vector<1x512xf32>
    %48 = arith.addf %39, %47 : vector<1x512xf32>
    %49 = vector.broadcast %3 : f32 to vector<1x512xf32>
    %50 = arith.mulf %49, %0 : vector<1x512xf32>
    %51 = vector.broadcast %13 : f32 to vector<1x512xf32>
    %52 = arith.addf %50, %51 : vector<1x512xf32>
    %cst_3 = arith.constant 0.000000e+00 : f32
    %53 = vector.broadcast %cst_3 : f32 to vector<1x512xf32>
    %54 = arith.maximumf %52, %53 : vector<1x512xf32>
    %55 = vector.broadcast %23 : f32 to vector<1x512xf32>
    %56 = arith.mulf %55, %54 : vector<1x512xf32>
    %57 = arith.addf %48, %56 : vector<1x512xf32>
    %58 = vector.broadcast %4 : f32 to vector<1x512xf32>
    %59 = arith.mulf %58, %0 : vector<1x512xf32>
    %60 = vector.broadcast %14 : f32 to vector<1x512xf32>
    %61 = arith.addf %59, %60 : vector<1x512xf32>
    %cst_4 = arith.constant 0.000000e+00 : f32
    %62 = vector.broadcast %cst_4 : f32 to vector<1x512xf32>
    %63 = arith.maximumf %61, %62 : vector<1x512xf32>
    %64 = vector.broadcast %24 : f32 to vector<1x512xf32>
    %65 = arith.mulf %64, %63 : vector<1x512xf32>
    %66 = arith.addf %57, %65 : vector<1x512xf32>
    %67 = vector.broadcast %5 : f32 to vector<1x512xf32>
    %68 = arith.mulf %67, %0 : vector<1x512xf32>
    %69 = vector.broadcast %15 : f32 to vector<1x512xf32>
    %70 = arith.addf %68, %69 : vector<1x512xf32>
    %cst_5 = arith.constant 0.000000e+00 : f32
    %71 = vector.broadcast %cst_5 : f32 to vector<1x512xf32>
    %72 = arith.maximumf %70, %71 : vector<1x512xf32>
    %73 = vector.broadcast %25 : f32 to vector<1x512xf32>
    %74 = arith.mulf %73, %72 : vector<1x512xf32>
    %75 = arith.addf %66, %74 : vector<1x512xf32>
    %76 = vector.broadcast %6 : f32 to vector<1x512xf32>
    %77 = arith.mulf %76, %0 : vector<1x512xf32>
    %78 = vector.broadcast %16 : f32 to vector<1x512xf32>
    %79 = arith.addf %77, %78 : vector<1x512xf32>
    %cst_6 = arith.constant 0.000000e+00 : f32
    %80 = vector.broadcast %cst_6 : f32 to vector<1x512xf32>
    %81 = arith.maximumf %79, %80 : vector<1x512xf32>
    %82 = vector.broadcast %26 : f32 to vector<1x512xf32>
    %83 = arith.mulf %82, %81 : vector<1x512xf32>
    %84 = arith.addf %75, %83 : vector<1x512xf32>
    %85 = vector.broadcast %7 : f32 to vector<1x512xf32>
    %86 = arith.mulf %85, %0 : vector<1x512xf32>
    %87 = vector.broadcast %17 : f32 to vector<1x512xf32>
    %88 = arith.addf %86, %87 : vector<1x512xf32>
    %cst_7 = arith.constant 0.000000e+00 : f32
    %89 = vector.broadcast %cst_7 : f32 to vector<1x512xf32>
    %90 = arith.maximumf %88, %89 : vector<1x512xf32>
    %91 = vector.broadcast %27 : f32 to vector<1x512xf32>
    %92 = arith.mulf %91, %90 : vector<1x512xf32>
    %93 = arith.addf %84, %92 : vector<1x512xf32>
    %94 = vector.broadcast %8 : f32 to vector<1x512xf32>
    %95 = arith.mulf %94, %0 : vector<1x512xf32>
    %96 = vector.broadcast %18 : f32 to vector<1x512xf32>
    %97 = arith.addf %95, %96 : vector<1x512xf32>
    %cst_8 = arith.constant 0.000000e+00 : f32
    %98 = vector.broadcast %cst_8 : f32 to vector<1x512xf32>
    %99 = arith.maximumf %97, %98 : vector<1x512xf32>
    %100 = vector.broadcast %28 : f32 to vector<1x512xf32>
    %101 = arith.mulf %100, %99 : vector<1x512xf32>
    %102 = arith.addf %93, %101 : vector<1x512xf32>
    %103 = vector.broadcast %9 : f32 to vector<1x512xf32>
    %104 = arith.mulf %103, %0 : vector<1x512xf32>
    %105 = vector.broadcast %19 : f32 to vector<1x512xf32>
    %106 = arith.addf %104, %105 : vector<1x512xf32>
    %cst_9 = arith.constant 0.000000e+00 : f32
    %107 = vector.broadcast %cst_9 : f32 to vector<1x512xf32>
    %108 = arith.maximumf %106, %107 : vector<1x512xf32>
    %109 = vector.broadcast %29 : f32 to vector<1x512xf32>
    %110 = arith.mulf %109, %108 : vector<1x512xf32>
    %111 = arith.addf %102, %110 : vector<1x512xf32>
    %112 = vector.broadcast %10 : f32 to vector<1x512xf32>
    %113 = arith.mulf %112, %0 : vector<1x512xf32>
    %114 = vector.broadcast %20 : f32 to vector<1x512xf32>
    %115 = arith.addf %113, %114 : vector<1x512xf32>
    %cst_10 = arith.constant 0.000000e+00 : f32
    %116 = vector.broadcast %cst_10 : f32 to vector<1x512xf32>
    %117 = arith.maximumf %115, %116 : vector<1x512xf32>
    %118 = vector.broadcast %30 : f32 to vector<1x512xf32>
    %119 = arith.mulf %118, %117 : vector<1x512xf32>
    %120 = arith.addf %111, %119 : vector<1x512xf32>
    %121 = vector.broadcast %31 : f32 to vector<1x512xf32>
    %122 = arith.addf %120, %121 : vector<1x512xf32>
    %c0_11 = arith.constant 0 : index
    %c0_12 = arith.constant 0 : index
    %123 = vector.load %arg3[%c0_11, %c0_12] : memref<1x512xf32, #tpu.memory_space<vmem>>, vector<1x512xf32>
    tpu.vector_store %arg3[%c0_11, %c0_12], %122 {strides = array<i32>} : memref<1x512xf32, #tpu.memory_space<vmem>>, vector<1x512xf32>,
    return
  }
  func.func @transform_0(%arg0: i32) -> i32 {
    %c0_i32 = arith.constant 0 : i32
    %c0_i32_0 = arith.constant 0 : i32
    return %c0_i32 : i32
  }
  func.func @transform_1(%arg0: i32) -> (i32, i32) {
    %c0_i32 = arith.constant 0 : i32
    %c0_i32_0 = arith.constant 0 : i32
    return %arg0, %c0_i32 : i32, i32
  }
  func.func @transform_2(%arg0: i32) -> (i32, i32) {
    %c0_i32 = arith.constant 0 : i32
    %c0_i32_0 = arith.constant 0 : i32
    return %arg0, %c0_i32 : i32, i32
  }
}

</mosaic_0001>

<llo_original>
// kernel: tpu_custom_call.1
$region0: #{tpu_custom_call.1}
  #allocation0 [shape = 'u32[]', space=smem, size = 0x4, offset = 0x4, fixed_abs, tag = 'smem constant byte address 0x4 - core index']
  #allocation1 [shape = 'u32[144,128]{1,0:T(1,128)}', space=vmem, size = 0x12000, scoped, tag = 'internal scratch']
  %s0 = inlined_call_operand.hbm [shape: f32[31], index: 0, kind: input, shape index: {}]
  %s1 = inlined_call_operand.hbm [shape: f32[1,512], index: 1, kind: input, shape index: {}]
  %s2 = inlined_call_operand.hbm [shape: f32[1,512], index: 2, kind: output, shape index: {}]
  %s3 = sld [smem:[#allocation0]]
  $region26: #{tpu_custom_call.1} parent=0
    _
  %s5 = ssub.s32 1, %s3
  %s6 = scalar_select 0, %s5, %s3
  $region1: #{tpu_custom_call.1} parent=0
    #allocation2 [shape = 'u8[512]{0}', space=smem, size = 0x200, scoped, tag = 'input window, operand 0, single buffered']
    #allocation3 [shape = 's32[1]{0}', space=sflag, size = 0x4, scoped, tag = 'scoped memory for tpu_custom_call.1']
    #allocation4 [shape = 's32[1]{0}', space=sflag, size = 0x4, scoped, tag = 'scoped memory for tpu_custom_call.1']
    #allocation5 [shape = 's32[1]{0}', space=sflag, size = 0x4, scoped, tag = 'scoped memory for tpu_custom_call.1']
    #allocation6 [shape = 'u8[2048]{0}', space=vmem, size = 0x800, scoped, tag = 'input window, operand 1, single buffered']
    #allocation7 [shape = 'u8[2048]{0}', space=vmem, size = 0x800, scoped, tag = 'output window, operand 0, single buffered']
    %7 = vsyncpa [#allocation5], 0
    %8 = vsyncpa [#allocation3], 0
    %9 = vsyncpa [#allocation4], 0
    // Predicated region
    $region2: #{tpu_custom_call.1} parent=1 // pred_check
      _
    $region3: #{tpu_custom_call.1} parent=1 // pred_check_branch
      %11 = sbr.rel (0) target = $region5
    $region4: #{tpu_custom_call.1} parent=1 // pred_region
      %s13 = ssub.s32 16, 16
      %14 = vsyncadd [#allocation5], %s13
      %17 = dma.hbm_to_smem %s0, 16, [#allocation2], [#allocation5]
    $region5: #{tpu_custom_call.1} parent=1 // pred_fallthru
      _
    // Predicated region
    $region6: #{tpu_custom_call.1} parent=1 // pred_check
      _
    $region7: #{tpu_custom_call.1} parent=1 // pred_check_branch
      %19 = sbr.rel (0) target = $region9
    $region8: #{tpu_custom_call.1} parent=1 // pred_region
      %s21 = ssub.s32 64, 64
      %22 = vsyncadd [#allocation3], %s21
      %s24 = sshll.u32 [#allocation6], 4
      %s25 = int_to_ptr.vmem [resolvable:$true] %s24
      %27 = dma.hbm_to_vmem [thread:$0]  %s1, 64, %s25, [#allocation3]
    $region9: #{tpu_custom_call.1} parent=1 // pred_fallthru
      _
    // Predicated region
    $region10: #{tpu_custom_call.1} parent=1 // pred_check
      _
    $region11: #{tpu_custom_call.1} parent=1 // pred_check_branch
      %29 = sbr.rel (0) target = $region13
    $region12: #{tpu_custom_call.1} parent=1 // pred_region
      %30 = dma.done [#allocation5], 16
    $region13: #{tpu_custom_call.1} parent=1 // pred_fallthru
      _
    // Predicated region
    $region14: #{tpu_custom_call.1} parent=1 // pred_check
      _
    $region15: #{tpu_custom_call.1} parent=1 // pred_check_branch
      %32 = sbr.rel (0) target = $region17
    $region16: #{tpu_custom_call.1} parent=1 // pred_region
      %33 = dma.done [#allocation3], 64
    $region17: #{tpu_custom_call.1} parent=1 // pred_fallthru
      _
    %34 = sfence
    %v35 = vld [vmem:[#allocation6] sm:$0xf]
    %s36 = sld [smem:[#allocation2]]
    %s37 = sld [smem:[#allocation2 + $0x1]]
    %s38 = sld [smem:[#allocation2 + $0x2]]
    %s39 = sld [smem:[#allocation2 + $0x3]]
    %s40 = sld [smem:[#allocation2 + $0x4]]
    %s41 = sld [smem:[#allocation2 + $0x5]]
    %s42 = sld [smem:[#allocation2 + $0x6]]
    %s43 = sld [smem:[#allocation2 + $0x7]]
    %s44 = sld [smem:[#allocation2 + $0x8]]
    %s45 = sld [smem:[#allocation2 + $0x9]]
    %s46 = sld [smem:[#allocation2 + $0xa]]
    %s47 = sld [smem:[#allocation2 + $0xb]]
    %s48 = sld [smem:[#allocation2 + $0xc]]
    %s49 = sld [smem:[#allocation2 + $0xd]]
    %s50 = sld [smem:[#allocation2 + $0xe]]
    %s51 = sld [smem:[#allocation2 + $0xf]]
    %s52 = sld [smem:[#allocation2 + $0x10]]
    %s53 = sld [smem:[#allocation2 + $0x11]]
    %s54 = sld [smem:[#allocation2 + $0x12]]
    %s55 = sld [smem:[#allocation2 + $0x13]]
    %s56 = sld [smem:[#allocation2 + $0x14]]
    %s57 = sld [smem:[#allocation2 + $0x15]]
    %s58 = sld [smem:[#allocation2 + $0x16]]
    %s59 = sld [smem:[#allocation2 + $0x17]]
    %s60 = sld [smem:[#allocation2 + $0x18]]
    %s61 = sld [smem:[#allocation2 + $0x19]]
    %s62 = sld [smem:[#allocation2 + $0x1a]]
    %s63 = sld [smem:[#allocation2 + $0x1b]]
    %s64 = sld [smem:[#allocation2 + $0x1c]]
    %s65 = sld [smem:[#allocation2 + $0x1d]]
    %s66 = sld [smem:[#allocation2 + $0x1e]]
    %v67 = vstv %s36
    %v68 = vmul.f32 %v67, %v35
    %v69 = vstv %s46
    %v70 = vadd.f32 %v68, %v69
    %v71 = vmax.f32 %v70, 0.0
    %v72 = vstv %s56
    %v73 = vmul.f32 %v72, %v71
    %v74 = vstv %s37
    %v75 = vmul.f32 %v74, %v35
    %v76 = vstv %s47
    %v77 = vadd.f32 %v75, %v76
    %v78 = vmax.f32 %v77, 0.0
    %v79 = vstv %s57
    %v80 = vmul.f32 %v79, %v78
    %v81 = vadd.f32 %v73, %v80
    %v82 = vstv %s38
    %v83 = vmul.f32 %v82, %v35
    %v84 = vstv %s48
    %v85 = vadd.f32 %v83, %v84
    %v86 = vmax.f32 %v85, 0.0
    %v87 = vstv %s58
    %v88 = vmul.f32 %v87, %v86
    %v89 = vadd.f32 %v81, %v88
    %v90 = vstv %s39
    %v91 = vmul.f32 %v90, %v35
    %v92 = vstv %s49
    %v93 = vadd.f32 %v91, %v92
    %v94 = vmax.f32 %v93, 0.0
    %v95 = vstv %s59
    %v96 = vmul.f32 %v95, %v94
    %v97 = vadd.f32 %v89, %v96
    %v98 = vstv %s40
    %v99 = vmul.f32 %v98, %v35
    %v100 = vstv %s50
    %v101 = vadd.f32 %v99, %v100
    %v102 = vmax.f32 %v101, 0.0
    %v103 = vstv %s60
    %v104 = vmul.f32 %v103, %v102
    %v105 = vadd.f32 %v97, %v104
    %v106 = vstv %s41
    %v107 = vmul.f32 %v106, %v35
    %v108 = vstv %s51
    %v109 = vadd.f32 %v107, %v108
    %v110 = vmax.f32 %v109, 0.0
    %v111 = vstv %s61
    %v112 = vmul.f32 %v111, %v110
    %v113 = vadd.f32 %v105, %v112
    %v114 = vstv %s42
    %v115 = vmul.f32 %v114, %v35
    %v116 = vstv %s52
    %v117 = vadd.f32 %v115, %v116
    %v118 = vmax.f32 %v117, 0.0
    %v119 = vstv %s62
    %v120 = vmul.f32 %v119, %v118
    %v121 = vadd.f32 %v113, %v120
    %v122 = vstv %s43
    %v123 = vmul.f32 %v122, %v35
    %v124 = vstv %s53
    %v125 = vadd.f32 %v123, %v124
    %v126 = vmax.f32 %v125, 0.0
    %v127 = vstv %s63
    %v128 = vmul.f32 %v127, %v126
    %v129 = vadd.f32 %v121, %v128
    %v130 = vstv %s44
    %v131 = vmul.f32 %v130, %v35
    %v132 = vstv %s54
    %v133 = vadd.f32 %v131, %v132
    %v134 = vmax.f32 %v133, 0.0
    %v135 = vstv %s64
    %v136 = vmul.f32 %v135, %v134
    %v137 = vadd.f32 %v129, %v136
    %v138 = vstv %s45
    %v139 = vmul.f32 %v138, %v35
    %v140 = vstv %s55
    %v141 = vadd.f32 %v139, %v140
    %v142 = vmax.f32 %v141, 0.0
    %v143 = vstv %s65
    %v144 = vmul.f32 %v143, %v142
    %v145 = vadd.f32 %v137, %v144
    %v146 = vstv %s66
    %v147 = vadd.f32 %v145, %v146
    %v148 = vlaneseq
    %vm149 = vcmp.ge.s32.totalorder %v148, 0
    %vm150 = vcmp.lt.s32.totalorder %v148, 512
    %vm151 = vmand %vm149, %vm150
    %152 = vst.msk [vmem:[#allocation7] sm:$0xf] %vm151, %v147
    // Predicated region
    $region18: #{tpu_custom_call.1} parent=1 // pred_check
      _
    $region19: #{tpu_custom_call.1} parent=1 // pred_check_branch
      %154 = sbr.rel (0) target = $region21
    $region20: #{tpu_custom_call.1} parent=1 // pred_region
      %s156 = ssub.s32 64, 64
      %157 = vsyncadd [#allocation4], %s156
      %s159 = sshll.u32 [#allocation7], 4
      %s160 = int_to_ptr.vmem [resolvable:$true] %s159
      %162 = dma.vmem_to_hbm [thread:$0]  %s160, 64, %s2, [#allocation4]
    $region21: #{tpu_custom_call.1} parent=1 // pred_fallthru
      _
    // Predicated region
    $region22: #{tpu_custom_call.1} parent=1 // pred_check
      _
    $region23: #{tpu_custom_call.1} parent=1 // pred_check_branch
      %164 = sbr.rel (0) target = $region25
    $region24: #{tpu_custom_call.1} parent=1 // pred_region
      %165 = dma.done [#allocation4], 64
    $region25: #{tpu_custom_call.1} parent=1 // pred_fallthru
      _
    %166 = vsyncpa [#allocation3], 1
    %167 = vsyncpa [#allocation4], 1
    %168 = vsyncpa [#allocation5], 1

</llo_original>
